<compile_context>
chip_gen: v7x
topology: tpu7x:2x2x1
jax: 0.10.0
libtpu: 0.0.40
codegen_flags: <defaults>
</compile_context>

<pallas_src>
import jax
import jax.numpy as jnp
from jax.experimental import pallas as pl
from jax.experimental.pallas import tpu as pltpu


def _round_up(x: int, m: int) -> int:
    return (x + m - 1) // m * m


# ---------------------------------------------------------------------------
# Parameter packing: all weights/biases in one VMEM-resident slab.
# Weights stored (out, in) for feature-major matmuls; biases stored as columns.
# Every slice offset is static and sublane(8)-aligned.
# ---------------------------------------------------------------------------
def pack_params(params):
    w1, w2, wm = params["w1"], params["w2"], params["wm"]
    b1 = params["b1"].reshape(-1)
    b2 = params["b2"].reshape(-1)
    bm = params["bm"].reshape(-1)
    obs_dim, h1 = w1.shape
    _, h2 = w2.shape
    _, act = wm.shape

    lane_w = max(obs_dim, h1, h2)
    rw1 = 0
    rw2 = _round_up(rw1 + h1, 8)
    rwm = _round_up(rw2 + h2, 8)
    rb1 = _round_up(rwm + act, 8)
    rb2 = _round_up(rb1 + h1, 8)
    rbm = _round_up(rb2 + h2, 8)
    rows = _round_up(rbm + act, 8)

    slab = jnp.zeros((rows, lane_w), jnp.float32)
    slab = slab.at[rw1:rw1 + h1, :obs_dim].set(w1.T.astype(jnp.float32))
    slab = slab.at[rw2:rw2 + h2, :h1].set(w2.T.astype(jnp.float32))
    slab = slab.at[rwm:rwm + act, :h2].set(wm.T.astype(jnp.float32))
    slab = slab.at[rb1:rb1 + h1, 0].set(b1.astype(jnp.float32))
    slab = slab.at[rb2:rb2 + h2, 0].set(b2.astype(jnp.float32))
    slab = slab.at[rbm:rbm + act, 0].set(bm.astype(jnp.float32))

    layout = dict(obs_dim=obs_dim, h1=h1, h2=h2, act=act,
                  rw1=rw1, rw2=rw2, rwm=rwm, rb1=rb1, rb2=rb2, rbm=rbm)
    return slab, layout


# ---------------------------------------------------------------------------
# Pallas kernel: fused MLP (2 hidden tanh layers) + Gaussian mean head,
# computed feature-major: activations are (features, TILE_B) with batch on lanes.
# ---------------------------------------------------------------------------
def _make_actor_kernel(L):
    obs_dim, h1, h2, act = L["obs_dim"], L["h1"], L["h2"], L["act"]
    rw1, rw2, rwm = L["rw1"], L["rw2"], L["rwm"]
    rb1, rb2, rbm = L["rb1"], L["rb2"], L["rbm"]

    def kernel(obs_ref, p_ref, mean_ref):
        # obs block is (TILE_B, obs_dim); cast to f32 in-register (bf16 I/O ok).
        x = obs_ref[...].astype(jnp.float32)

        # hidden layer 1: tanh(W1 @ x^T + b1) -> (h1, TILE_B)
        w1 = p_ref[rw1:rw1 + h1, 0:obs_dim]               # (h1, obs_dim)
        b1 = p_ref[rb1:rb1 + h1, 0:1]                     # (h1, 1)
        h = jnp.tanh(
            jnp.einsum("hk,bk->hb", w1, x, preferred_element_type=jnp.float32)
            + b1)

        # hidden layer 2: tanh(W2 @ h + b2) -> (h2, TILE_B)
        w2 = p_ref[rw2:rw2 + h2, 0:h1]                    # (h2, h1)
        b2 = p_ref[rb2:rb2 + h2, 0:1]                     # (h2, 1)
        h = jnp.tanh(jnp.dot(w2, h, preferred_element_type=jnp.float32) + b2)

        # policy mean head (orthogonal init gain 0.01 in the original module):
        # lane-dense (act, TILE_B) store.
        wm = p_ref[rwm:rwm + act, 0:h2]                   # (act, h2)
        bm = p_ref[rbm:rbm + act, 0:1]                    # (act, 1)
        mean_ref[...] = (jnp.dot(wm, h, preferred_element_type=jnp.float32)
                         + bm).astype(mean_ref.dtype)

    return kernel


def actor_forward(obs, params, *, tile_b=2048):
    """Returns ((mean, std), states).

    mean: (B, A) f32.  std: (1, A) = exp(log_std) (state-independent; broadcasts
    against mean exactly like torch.distributions.Normal).  states: None.

    tile_b: batch tile (multiple of 128).  Big tiles amortize the ~0.35 us
    per-grid-step overhead; even tile_b=8192 stays well under 1 MiB/buffer.
    """
    B, obs_dim = obs.shape
    slab, L = pack_params(params)
    act = L["act"]

    tile_b = max(128, min(tile_b, _round_up(B, 128)))
    tile_b = _round_up(tile_b, 128)
    b_pad = _round_up(B, tile_b)
    obs_p = obs if b_pad == B else jnp.pad(obs, ((0, b_pad - B), (0, 0)))
    n_tiles = b_pad // tile_b

    mean_fm = pl.pallas_call(
        _make_actor_kernel(L),
        grid=(n_tiles,),
        in_specs=[
            pl.BlockSpec((tile_b, obs_dim), lambda i: (i, 0)),   # streamed obs
            pl.BlockSpec(slab.shape, lambda i: (0, 0)),          # resident params
        ],
        out_specs=pl.BlockSpec((act, tile_b), lambda i: (0, i)),  # lane-dense out
        out_shape=jax.ShapeDtypeStruct((act, b_pad), jnp.float32),
        compiler_params=pltpu.CompilerParams(
            dimension_semantics=("parallel",)),
    )(obs_p, slab)

    mean = mean_fm[:, :B].T                    # (B, A); tiny transpose in wrapper
    std = jnp.exp(params["log_std"])           # (1, A); obs-independent
    return (mean, std), None


# ---------------------------------------------------------------------------
# Deterministic parameter init (mirrors init_weights: orthogonal W, zero b,
# gain sqrt(2) for hidden layers, 0.01 for the dist head, log_std = 0).
# ---------------------------------------------------------------------------
def orthogonal(key, shape, gain):
    rows, cols = shape
    a = jax.random.normal(key, (max(rows, cols), min(rows, cols)), dtype=jnp.float32)
    q, r = jnp.linalg.qr(a)
    q = q * jnp.where(jnp.diag(r) >= 0, 1.0, -1.0)   # avoid sign(0)=0 zeroing a column
    if rows < cols:
        q = q.T
    return (gain * q[:rows, :cols]).astype(jnp.float32)


def make_params(key, obs_dim, hidden_sizes, action_dim):
    h1, h2 = hidden_sizes
    k1, k2, k3 = jax.random.split(key, 3)
    return {
        "w1": orthogonal(k1, (obs_dim, h1), gain=jnp.sqrt(2.0)),
        "b1": jnp.zeros((1, h1), jnp.float32),
        "w2": orthogonal(k2, (h1, h2), gain=jnp.sqrt(2.0)),
        "b2": jnp.zeros((1, h2), jnp.float32),
        "wm": orthogonal(k3, (h2, action_dim), gain=0.01),
        "bm": jnp.zeros((1, action_dim), jnp.float32),
        "log_std": jnp.zeros((1, action_dim), jnp.float32),
    }


def ref_forward(obs, p):
    h = jnp.tanh(obs @ p["w1"] + p["b1"])
    h = jnp.tanh(h @ p["w2"] + p["b2"])
    mean = h @ p["wm"] + p["bm"]
    std = jnp.exp(p["log_std"])
    return mean, std


if __name__ == "__main__":
    key = jax.random.PRNGKey(0)
    k_obs, k_params = jax.random.split(key)

    B, OBS_DIM, HIDDEN, ACT_DIM = 512, 16, [32, 32], 4
    TILE_B = 128    # grid=(4,): exercises batch tiling / pipelining / parallel axis

    obs = jax.random.normal(k_obs, (B, OBS_DIM), dtype=jnp.float32)
    params = make_params(k_params, OBS_DIM, HIDDEN, ACT_DIM)

    # TODO(synk): Cnn feature extractor (len(obs_dim)==3), Rnn (rnn != None), and
    # Discrete / conditional-std heads are config branches not exercised here.

    @jax.jit
    def fwd(o, p):
        return actor_forward(o, p, tile_b=TILE_B)

    (mean, std), states = fwd(obs, params)
    jax.block_until_ready(mean)
    jax.block_until_ready(std)

    mean_ref, std_ref = ref_forward(obs, params)
    assert mean.shape == (B, ACT_DIM)
    assert std.shape == (1, ACT_DIM)
    assert states is None
    assert jnp.allclose(mean, mean_ref, atol=1e-4, rtol=1e-3)
    assert jnp.allclose(std, std_ref, atol=1e-6, rtol=1e-6)
    _ = mean / std   # std broadcasts against mean like torch Normal

    # bf16 observation path (halved input HBM bytes; compute stays f32 in-kernel).
    obs_bf16 = obs.astype(jnp.bfloat16)
    (mean_b, _), _ = fwd(obs_bf16, params)
    jax.block_until_ready(mean_b)
    mean_ref_b, _ = ref_forward(obs_bf16.astype(jnp.float32), params)
    assert jnp.allclose(mean_b, mean_ref_b, atol=1e-4, rtol=1e-3)

    # Ragged batch (B not a multiple of the tile): padded in the wrapper,
    # result sliced back — exercises the default-tile path (single grid step).
    B2 = 200
    obs2 = jax.random.normal(jax.random.PRNGKey(1), (B2, OBS_DIM), jnp.float32)
    (mean2, _), _ = jax.jit(actor_forward)(obs2, params)
    jax.block_until_ready(mean2)
    mean2_ref, _ = ref_forward(obs2, params)
    assert mean2.shape == (B2, ACT_DIM)
    assert jnp.allclose(mean2, mean2_ref, atol=1e-4, rtol=1e-3)

    print("KERNEL_OK")
</pallas_src>

<mosaic_0001>
module attributes {stable_mosaic.version = 11 : i64} {
  func.func @kernel(%arg0: i32, %arg1: memref<128x16xf32, #tpu.memory_space<vmem>>, %arg2: memref<144x32xf32, #tpu.memory_space<vmem>>, %arg3: memref<4x128xf32, #tpu.memory_space<vmem>>) attributes {dimension_semantics = [#tpu.dimension_semantics<parallel>], iteration_bounds = array<i64: 4>, scalar_prefetch = 0 : i64, scratch_operands = 0 : i64, tpu.core_type = #tpu.core_type<tc>, window_params = [{transform_indices = @transform_0, window_bounds = array<i64: 128, 16>}, {pipeline_mode = #tpu.pipeline_mode<synchronous>, transform_indices = @transform_1, window_bounds = array<i64: 144, 32>}, {transform_indices = @transform_2, window_bounds = array<i64: 4, 128>}]} {
    %c0 = arith.constant 0 : index
    %c0_0 = arith.constant 0 : index
    %0 = vector.load %arg1[%c0, %c0_0] : memref<128x16xf32, #tpu.memory_space<vmem>>, vector<128x16xf32>
    %c0_1 = arith.constant 0 : index
    %c0_2 = arith.constant 0 : index
    %1 = vector.load %arg2[%c0_1, %c0_2] : memref<144x32xf32, #tpu.memory_space<vmem>>, vector<32x16xf32>
    %c72 = arith.constant 72 : index
    %c0_3 = arith.constant 0 : index
    %2 = vector.load %arg2[%c72, %c0_3] : memref<144x32xf32, #tpu.memory_space<vmem>>, vector<32x1xf32>
    "tpu.trace_start"() <{level = 10 : i32, message = "hk,bk->hb"}> : () -> ()
    %cst = arith.constant dense<0.000000e+00> : vector<32x128xf32>
    %3 = tpu.matmul %1, %0, %cst {dimension_numbers = #tpu.dot_dimension_numbers<[1], [1], [0], [0], [0, 0, 1, 0], [], []>} : vector<32x16xf32>, vector<128x16xf32>, vector<32x128xf32> -> vector<32x128xf32>
    "tpu.trace_stop"() : () -> ()
    %4 = vector.broadcast %2 : vector<32x1xf32> to vector<32x128xf32>
    %5 = arith.addf %3, %4 : vector<32x128xf32>
    %6 = math.tanh %5 : vector<32x128xf32>
    %c32 = arith.constant 32 : index
    %c0_4 = arith.constant 0 : index
    %7 = vector.load %arg2[%c32, %c0_4] : memref<144x32xf32, #tpu.memory_space<vmem>>, vector<32x32xf32>
    %c104 = arith.constant 104 : index
    %c0_5 = arith.constant 0 : index
    %8 = vector.load %arg2[%c104, %c0_5] : memref<144x32xf32, #tpu.memory_space<vmem>>, vector<32x1xf32>
    %cst_6 = arith.constant dense<0.000000e+00> : vector<32x128xf32>
    %9 = tpu.matmul %7, %6, %cst_6 {dimension_numbers = #tpu.dot_dimension_numbers<[1], [0], [0], [1], [0, 0, 1, 1], [], []>} : vector<32x32xf32>, vector<32x128xf32>, vector<32x128xf32> -> vector<32x128xf32>
    %10 = vector.broadcast %8 : vector<32x1xf32> to vector<32x128xf32>
    %11 = arith.addf %9, %10 : vector<32x128xf32>
    %12 = math.tanh %11 : vector<32x128xf32>
    %c64 = arith.constant 64 : index
    %c0_7 = arith.constant 0 : index
    %13 = vector.load %arg2[%c64, %c0_7] : memref<144x32xf32, #tpu.memory_space<vmem>>, vector<4x32xf32>
    %c136 = arith.constant 136 : index
    %c0_8 = arith.constant 0 : index
    %14 = vector.load %arg2[%c136, %c0_8] : memref<144x32xf32, #tpu.memory_space<vmem>>, vector<4x1xf32>
    %cst_9 = arith.constant dense<0.000000e+00> : vector<4x128xf32>
    %15 = tpu.matmul %13, %12, %cst_9 {dimension_numbers = #tpu.dot_dimension_numbers<[1], [0], [0], [1], [0, 0, 1, 1], [], []>} : vector<4x32xf32>, vector<32x128xf32>, vector<4x128xf32> -> vector<4x128xf32>
    %16 = vector.broadcast %14 : vector<4x1xf32> to vector<4x128xf32>
    %17 = arith.addf %15, %16 : vector<4x128xf32>
    %c0_10 = arith.constant 0 : index
    %c0_11 = arith.constant 0 : index
    %18 = vector.load %arg3[%c0_10, %c0_11] : memref<4x128xf32, #tpu.memory_space<vmem>>, vector<4x128xf32>
    tpu.vector_store %arg3[%c0_10, %c0_11], %17 {strides = array<i32>} : memref<4x128xf32, #tpu.memory_space<vmem>>, vector<4x128xf32>,
    return
  }
  func.func @transform_0(%arg0: i32) -> (i32, i32) {
    %c0_i32 = arith.constant 0 : i32
    %c0_i32_0 = arith.constant 0 : i32
    return %arg0, %c0_i32 : i32, i32
  }
  func.func @transform_1(%arg0: i32) -> (i32, i32) {
    %c0_i32 = arith.constant 0 : i32
    %c0_i32_0 = arith.constant 0 : i32
    %c0_i32_1 = arith.constant 0 : i32
    return %c0_i32, %c0_i32_0 : i32, i32
  }
  func.func @transform_2(%arg0: i32) -> (i32, i32) {
    %c0_i32 = arith.constant 0 : i32
    %c0_i32_0 = arith.constant 0 : i32
    return %c0_i32, %arg0 : i32, i32
  }
}

</mosaic_0001>

<llo_original>
// kernel: fwd.1
$region0: #{fwd.1}
  #allocation0 [shape = 'u32[]', space=smem, size = 0x4, offset = 0x4, fixed_abs, tag = 'smem constant byte address 0x4 - core index']
  #allocation1 [shape = 'u32[144,128]{1,0:T(1,128)}', space=vmem, size = 0x12000, scoped, tag = 'internal scratch']
  %s0 = inlined_call_operand.vmem [shape: f32[512,16], index: 0, kind: input, shape index: {}]
  %s1 = inlined_call_operand.vmem [shape: f32[144,32], index: 1, kind: input, shape index: {}]
  %s2 = inlined_call_operand.hbm [shape: f32[4,512], index: 2, kind: output, shape index: {}]
  %s3 = sld [smem:[#allocation0]]
  $region41: #{fwd.1} parent=0
    _
  %s5 = ssub.s32 1, %s3
  %s6 = scalar_select 0, %s5, %s3
  $region1: #{fwd.1} parent=0
    #allocation2 [shape = 'u8[4096]{0}', space=vmem, size = 0x1000, scoped, tag = 'output window, operand 0']
    #allocation3 [shape = 's32[2]{0}', space=sflag, size = 0x8, scoped, tag = 'scoped memory for fwd.1']
    %7 = vsyncpa [#allocation3], 0
    %s8 = scalar_lea.sflag [#allocation3], 1
    %9 = vsyncpa %s8, 0
    loop: start=0, step=1, limit=6
    $region2: #{fwd.1} parent=1 // loop_pre_header
      _
    $region3: #{fwd.1} parent=1 // loop_header
      %s11 = sphi 0, %s15
      %p12 = scmp.ge.s32.totalorder %s11, 6
      %s21 = sphi 0, %s23
      %s24 = sphi 0, %s21
      %s25 = sphi 0, %s24
      %s41 = sphi 0, %s25
      %s45 = sphi 0, %s45
      %s47 = sphi 0, %s45
      %s48 = sphi 0, %s47
      %s62 = sphi 0, %s48
      %s68 = sphi 0, %s70
      %s71 = sphi 0, %s68
      %s72 = sphi 0, %s71
      %s88 = sphi 0, %s72
    $region4: #{fwd.1} parent=1 // loop_header_branch
      %14 = sbr.rel (%p12) target = $region8
    $region5: #{fwd.1} parent=1 // loop_body
      %s16 = ssub.s32 %s11, 1
      %s17 = ssub.s32 %s11, 2
      %s18 = sadd.s32 %s11, 1
      %s19 = ssub.s32 %s11, %s18
      %p20 = scmp.eq.s32.totalorder %s19, 0
      %s22 = sadd.s32 %s21, 1
      %s23 = scalar_select %p20, %s21, %s22
      %p26 = pneg %p20
      %p27 = scmp.eq.s32.totalorder %s11, 3
      %p28 = por %p26, %p27
      %p29 = scmp.ne.s32.totalorder %s21, %s24
      %p30 = scmp.eq.s32.totalorder %s11, 0
      %p31 = por %p29, %p30
      %p32 = scmp.ne.s32.totalorder %s21, %s24
      %p33 = scmp.eq.s32.totalorder %s16, 3
      %p34 = por %p32, %p33
      %p35 = scmp.ne.s32.totalorder %s24, %s25
      %p36 = scmp.eq.s32.totalorder %s16, 0
      %p37 = por %p35, %p36
      %p38 = scmp.ne.s32.totalorder %s24, %s25
      %p39 = scmp.eq.s32.totalorder %s17, 3
      %p40 = por %p38, %p39
      %p42 = scmp.ne.s32.totalorder %s25, %s41
      %p43 = scmp.eq.s32.totalorder %s17, 0
      %p44 = por %p42, %p43
      %s46 = sadd.s32 %s45, 1
      %p49 = scmp.eq.s32.totalorder %s11, 3
      %p50 = scmp.ne.s32.totalorder %s45, %s47
      %p51 = scmp.eq.s32.totalorder %s11, 0
      %p52 = por %p50, %p51
      %p53 = scmp.ne.s32.totalorder %s45, %s47
      %p54 = scmp.eq.s32.totalorder %s16, 3
      %p55 = por %p53, %p54
      %p56 = scmp.ne.s32.totalorder %s47, %s48
      %p57 = scmp.eq.s32.totalorder %s16, 0
      %p58 = por %p56, %p57
      %p59 = scmp.ne.s32.totalorder %s47, %s48
      %p60 = scmp.eq.s32.totalorder %s17, 3
      %p61 = por %p59, %p60
      %p63 = scmp.ne.s32.totalorder %s48, %s62
      %p64 = scmp.eq.s32.totalorder %s17, 0
      %p65 = por %p63, %p64
      %s66 = ssub.s32 %s11, %s18
      %p67 = scmp.eq.s32.totalorder %s66, 0
      %s69 = sadd.s32 %s68, 1
      %s70 = scalar_select %p67, %s68, %s69
      %p73 = pneg %p67
      %p74 = scmp.eq.s32.totalorder %s11, 3
      %p75 = por %p73, %p74
      %p76 = scmp.ne.s32.totalorder %s68, %s71
      %p77 = scmp.eq.s32.totalorder %s11, 0
      %p78 = por %p76, %p77
      %p79 = scmp.ne.s32.totalorder %s68, %s71
      %p80 = scmp.eq.s32.totalorder %s16, 3
      %p81 = por %p79, %p80
      %p82 = scmp.ne.s32.totalorder %s71, %s72
      %p83 = scmp.eq.s32.totalorder %s16, 0
      %p84 = por %p82, %p83
      %p85 = scmp.ne.s32.totalorder %s71, %s72
      %p86 = scmp.eq.s32.totalorder %s17, 3
      %p87 = por %p85, %p86
      %p89 = scmp.ne.s32.totalorder %s72, %s88
      %p90 = scmp.eq.s32.totalorder %s17, 0
      %p91 = por %p89, %p90
      %p92 = scmp.le.s32.totalorder 1, %s11
      %p93 = scmp.lt.s32.totalorder %s11, 5
      %p94 = pnand %p92, %p93
      %p95 = pneg %p94
      // Predicated region
      $region9: #{fwd.1} parent=5 // pred_check
        _
      $region10: #{fwd.1} parent=5 // pred_check_branch
        %97 = sbr.rel (%p94) target = $region12
      $region11: #{fwd.1} parent=5 // pred_region
        %s98 = ssub.s32 %s11, 1
        // Predicated region
        $region13: #{fwd.1} parent=11 // pred_check
          %p99 = pneg %p58
        $region14: #{fwd.1} parent=11 // pred_check_branch
          %101 = sbr.rel (%p99) target = $region16
        $region15: #{fwd.1} parent=11 // pred_region
          _
        $region16: #{fwd.1} parent=11 // pred_fallthru
          _
      $region12: #{fwd.1} parent=5 // pred_fallthru
        _
      %p102 = scmp.lt.s32.totalorder %s11, 4
      // Predicated region
      $region17: #{fwd.1} parent=5 // pred_check
        %p103 = pneg %p102
      $region18: #{fwd.1} parent=5 // pred_check_branch
        %105 = sbr.rel (%p103) target = $region20
      $region19: #{fwd.1} parent=5 // pred_region
        // Predicated region
        $region21: #{fwd.1} parent=19 // pred_check
          %p106 = pneg %p31
        $region22: #{fwd.1} parent=19 // pred_check_branch
          %108 = sbr.rel (%p106) target = $region24
        $region23: #{fwd.1} parent=19 // pred_region
          %s109 = smul.u32 16, %s11
          %p110 = scmp.lt.s32.totalorder %s109, 63
          %s111 = scalar_select %p110, %s109, 63
          %s112 = smul.addr %s111, 8
          %s113 = scalar_lea.vmem %s0, %s112
          %s114 = smul.u32 16, %s11
        $region24: #{fwd.1} parent=19 // pred_fallthru
          _
      $region20: #{fwd.1} parent=5 // pred_fallthru
        _
      %p115 = scmp.le.s32.totalorder 1, %s11
      %p116 = scmp.lt.s32.totalorder %s11, 5
      %p117 = pnand %p115, %p116
      %p118 = pneg %p117
      // Predicated region
      $region25: #{fwd.1} parent=5 // pred_check
        _
      $region26: #{fwd.1} parent=5 // pred_check_branch
        %120 = sbr.rel (%p117) target = $region28
      $region27: #{fwd.1} parent=5 // pred_region
        %s121 = ssub.s32 %s11, 1
        %s122 = smul.u32 16, %s16
        %p123 = scmp.lt.s32.totalorder %s122, 63
        %s124 = scalar_select %p123, %s122, 63
        %s125 = smul.addr %s124, 8
        %s126 = scalar_lea.vmem %s0, %s125
        %p127 = pneg %p37
        %p128 = pneg %p34
        %p129 = pneg %p58
        %p130 = pneg %p55
        %p131 = pneg %p84
        %p132 = pneg %p81
        %s133 = sand.u32 %s71, 1
        %s134 = scalar_lea.sflag [#allocation3], %s133
        %s135 = sand.u32 %s71, 1
        %s136 = smul.addr %s135, 4
        %s137 = scalar_lea.vmem [#allocation2], %s136
        %s138 = smul.u32 16, %s16
        %p139 = scmp.lt.s32.totalorder %s138, 63
        %s140 = scalar_select %p139, %s138, 63
        %s141 = smul.addr %s140, 8
        %s142 = scalar_lea.vmem %s0, %s141
        %s143 = smul.u32 16, %s16
        %v144 = vld [vmem:[%s142] sm:$0xff]
        %v145 = vld [vmem:[%s142 + $0x8] sm:$0xff]
        %v146 = vld [vmem:[%s142 + $0x10] sm:$0xff]
        %v147 = vld [vmem:[%s142 + $0x18] sm:$0xff]
        %v148 = vld [vmem:[%s142 + $0x20] sm:$0xff]
        %v149 = vld [vmem:[%s142 + $0x28] sm:$0xff]
        %v150 = vld [vmem:[%s142 + $0x30] sm:$0xff]
        %v151 = vld [vmem:[%s142 + $0x38] sm:$0xff]
        %v152 = vld [vmem:[%s142 + $0x40] sm:$0xff]
        %v153 = vld [vmem:[%s142 + $0x48] sm:$0xff]
        %v154 = vld [vmem:[%s142 + $0x50] sm:$0xff]
        %v155 = vld [vmem:[%s142 + $0x58] sm:$0xff]
        %v156 = vld [vmem:[%s142 + $0x60] sm:$0xff]
        %v157 = vld [vmem:[%s142 + $0x68] sm:$0xff]
        %v158 = vld [vmem:[%s142 + $0x70] sm:$0xff]
        %v159 = vld [vmem:[%s142 + $0x78] sm:$0xff]
        %v160 = vld [vmem:[%s1] sm:$0xff]
        %v161 = vld [vmem:[%s1 + $0x8] sm:$0xff]
        %v162 = vld [vmem:[%s1 + $0x10] sm:$0xff]
        %v163 = vld [vmem:[%s1 + $0x18] sm:$0xff]
        %v164 = vld [vmem:[%s1 + $0x48] sm:$0xff]
        %v165 = vld [vmem:[%s1 + $0x50] sm:$0xff]
        %v166 = vld [vmem:[%s1 + $0x58] sm:$0xff]
        %v167 = vld [vmem:[%s1 + $0x60] sm:$0xff]
        %169 = vset.pattern.permute.xlu0 0
        %170 = vperm.xlu0 %169, %v164
        %v171 = vpop.permute.xlu0 %170
        %174 = vset.pattern.permute.xlu0 0
        %175 = vperm.xlu0 %174, %v165
        %v176 = vpop.permute.xlu0 %175
        %179 = vset.pattern.permute.xlu0 0
        %180 = vperm.xlu0 %179, %v166
        %v181 = vpop.permute.xlu0 %180
        %184 = vset.pattern.permute.xlu0 0
        %185 = vperm.xlu0 %184, %v167
        %v186 = vpop.permute.xlu0 %185
        %vm188 = vcmask 130048
        %v190 = vsel %vm188, %v160, 0
        %v193 = vsel %vm188, %v161, 0
        %v196 = vsel %vm188, %v162, 0
        %v199 = vsel %vm188, %v163, 0
        %v202 = vsel %vm188, %v144, 0
        %v205 = vsel %vm188, %v145, 0
        %v208 = vsel %vm188, %v146, 0
        %v211 = vsel %vm188, %v147, 0
        %v214 = vsel %vm188, %v148, 0
        %v217 = vsel %vm188, %v149, 0
        %v220 = vsel %vm188, %v150, 0
        %v223 = vsel %vm188, %v151, 0
        %v226 = vsel %vm188, %v152, 0
        %v229 = vsel %vm188, %v153, 0
        %v232 = vsel %vm188, %v154, 0
        %v235 = vsel %vm188, %v155, 0
        %v238 = vsel %vm188, %v156, 0
        %v241 = vsel %vm188, %v157, 0
        %v244 = vsel %vm188, %v158, 0
        %v247 = vsel %vm188, %v159, 0
        %249 = vmatprep.subr.mxu0 0.0
        %250 = vmatpush1.xpose.msra.mxu0 %v202
        %251 = vmatprep.subr.mxu0 0.0
        %252 = vmatpush1.xpose.msra.mxu0 %v205
        %253 = vmatprep.subr.mxu0 0.0
        %254 = vmatpush1.xpose.msra.mxu0 %v208
        %255 = vmatprep.subr.mxu0 0.0
        %256 = vmatpush1.xpose.msra.mxu0 %v211
        %257 = vmatprep.subr.mxu0 0.0
        %258 = vmatpush1.xpose.msra.mxu0 %v214
        %259 = vmatprep.subr.mxu0 0.0
        %260 = vmatpush1.xpose.msra.mxu0 %v217
        %261 = vmatprep.subr.mxu0 0.0
        %262 = vmatpush1.xpose.msra.mxu0 %v220
        %263 = vmatprep.subr.mxu0 0.0
        %264 = vmatpush1.xpose.msra.mxu0 %v223
        %265 = vmatprep.subr.mxu0 0.0
        %266 = vmatpush1.xpose.msra.mxu0 %v226
        %267 = vmatprep.subr.mxu0 0.0
        %268 = vmatpush1.xpose.msra.mxu0 %v229
        %269 = vmatprep.subr.mxu0 0.0
        %270 = vmatpush1.xpose.msra.mxu0 %v232
        %271 = vmatprep.subr.mxu0 0.0
        %272 = vmatpush1.xpose.msra.mxu0 %v235
        %273 = vmatprep.subr.mxu0 0.0
        %274 = vmatpush1.xpose.msra.mxu0 %v238
        %275 = vmatprep.subr.mxu0 0.0
        %276 = vmatpush1.xpose.msra.mxu0 %v241
        %277 = vmatprep.subr.mxu0 0.0
        %278 = vmatpush1.xpose.msra.mxu0 %v244
        %279 = vmatprep.subr.mxu0 0.0
        %280 = vmatpush1.xpose.msra.mxu0 %v247
        %281 = vmatprep.subr.mxu0 0.0
        %282 = vmatpush1.xpose.msra.mxu0 0.0
        %283 = vmatprep.subr.mxu0 0.0
        %284 = vmatpush1.xpose.msra.mxu0 0.0
        %285 = vmatprep.subr.mxu0 0.0
        %286 = vmatpush1.xpose.msra.mxu0 0.0
        %287 = vmatprep.subr.mxu0 0.0
        %288 = vmatpush1.xpose.msra.mxu0 0.0
        %289 = vmatprep.subr.mxu0 0.0
        %290 = vmatpush1.xpose.msra.mxu0 0.0
        %291 = vmatprep.subr.mxu0 0.0
        %292 = vmatpush1.xpose.msra.mxu0 0.0
        %293 = vmatprep.subr.mxu0 0.0
        %294 = vmatpush1.xpose.msra.mxu0 0.0
        %295 = vmatprep.subr.mxu0 0.0
        %296 = vmatpush1.xpose.msra.mxu0 0.0
        %297 = vmatprep.subr.mxu0 0.0
        %298 = vmatpush1.xpose.msra.mxu0 0.0
        %299 = vmatprep.subr.mxu0 0.0
        %300 = vmatpush1.xpose.msra.mxu0 0.0
        %301 = vmatprep.subr.mxu0 0.0
        %302 = vmatpush1.xpose.msra.mxu0 0.0
        %303 = vmatprep.subr.mxu0 0.0
        %304 = vmatpush1.xpose.msra.mxu0 0.0
        %305 = vmatprep.subr.mxu0 0.0
        %306 = vmatpush1.xpose.msra.mxu0 0.0
        %307 = vmatprep.subr.mxu0 0.0
        %308 = vmatpush1.xpose.msra.mxu0 0.0
        %309 = vmatprep.subr.mxu0 0.0
        %310 = vmatpush1.xpose.msra.mxu0 0.0
        %311 = vmatprep.subr.mxu0 0.0
        %312 = vmatpush1.xpose.msra.mxu0 0.0
        %313 = vmatprep.mubr.f32.mxu0 0.0
        %314 = vmatmul.mubr.f32.gmra.mrb[0].mxu0 %v190
        %v315 = vpop.f32.mrb[0].mxu0
        %v316 = vadd.f32 %v171, %v315
        %v317 = vpop.f32.mrb[0].mxu0
        %318 = vmatprep.mubr.f32.mxu0 0.0
        %319 = vmatmul.mubr.f32.gmra.mrb[0].mxu0 %v193
        %v320 = vpop.f32.mrb[0].mxu0
        %v321 = vadd.f32 %v176, %v320
        %v322 = vpop.f32.mrb[0].mxu0
        %323 = vmatprep.mubr.f32.mxu0 0.0
        %324 = vmatmul.mubr.f32.gmra.mrb[0].mxu0 %v196
        %v325 = vpop.f32.mrb[0].mxu0
        %v326 = vadd.f32 %v181, %v325
        %v327 = vpop.f32.mrb[0].mxu0
        %328 = vmatprep.mubr.f32.mxu0 0.0
        %329 = vmatmul.mubr.f32.gmra.mrb[0].mxu0 %v199
        %v330 = vpop.f32.mrb[0].mxu0
        %v331 = vadd.f32 %v186, %v330
        %v332 = vpop.f32.mrb[0].mxu0
        %333 = vdwg.mxu0
        %v334 = vtanh.pop %v316
        %v335 = vtanh.pop %v321
        %v336 = vtanh.pop %v326
        %v337 = vtanh.pop %v331
        %v338 = vld [vmem:[%s1 + $0x20] sm:$0xff]
        %v339 = vld [vmem:[%s1 + $0x28] sm:$0xff]
        %v340 = vld [vmem:[%s1 + $0x30] sm:$0xff]
        %v341 = vld [vmem:[%s1 + $0x38] sm:$0xff]
        %v342 = vld [vmem:[%s1 + $0x68] sm:$0xff]
        %v343 = vld [vmem:[%s1 + $0x70] sm:$0xff]
        %v344 = vld [vmem:[%s1 + $0x78] sm:$0xff]
        %v345 = vld [vmem:[%s1 + $0x80] sm:$0xff]
        %347 = vset.pattern.permute.xlu0 0
        %348 = vperm.xlu0 %347, %v342
        %v349 = vpop.permute.xlu0 %348
        %352 = vset.pattern.permute.xlu0 0
        %353 = vperm.xlu0 %352, %v343
        %v354 = vpop.permute.xlu0 %353
        %357 = vset.pattern.permute.xlu0 0
        %358 = vperm.xlu0 %357, %v344
        %v359 = vpop.permute.xlu0 %358
        %362 = vset.pattern.permute.xlu0 0
        %363 = vperm.xlu0 %362, %v345
        %v364 = vpop.permute.xlu0 %363
        %vm366 = vcmask 261120
        %v368 = vsel %vm366, %v338, 0
        %v371 = vsel %vm366, %v339, 0
        %v374 = vsel %vm366, %v340, 0
        %v377 = vsel %vm366, %v341, 0
        %379 = vmatprep.subr.mxu0 0.0
        %380 = vmatpush1.msra.mxu0 %v334
        %381 = vmatprep.subr.mxu0 0.0
        %382 = vmatpush1.msra.mxu0 %v335
        %383 = vmatprep.subr.mxu0 0.0
        %384 = vmatpush1.msra.mxu0 %v336
        %385 = vmatprep.subr.mxu0 0.0
        %386 = vmatpush1.msra.mxu0 %v337
        %387 = vmatprep.subr.mxu0 0.0
        %388 = vmatpush1.msra.mxu0 0.0
        %389 = vmatprep.subr.mxu0 0.0
        %390 = vmatpush1.msra.mxu0 0.0
        %391 = vmatprep.subr.mxu0 0.0
        %392 = vmatpush1.msra.mxu0 0.0
        %393 = vmatprep.subr.mxu0 0.0
        %394 = vmatpush1.msra.mxu0 0.0
        %395 = vmatprep.subr.mxu0 0.0
        %396 = vmatpush1.msra.mxu0 0.0
        %397 = vmatprep.subr.mxu0 0.0
        %398 = vmatpush1.msra.mxu0 0.0
        %399 = vmatprep.subr.mxu0 0.0
        %400 = vmatpush1.msra.mxu0 0.0
        %401 = vmatprep.subr.mxu0 0.0
        %402 = vmatpush1.msra.mxu0 0.0
        %403 = vmatprep.subr.mxu0 0.0
        %404 = vmatpush1.msra.mxu0 0.0
        %405 = vmatprep.subr.mxu0 0.0
        %406 = vmatpush1.msra.mxu0 0.0
        %407 = vmatprep.subr.mxu0 0.0
        %408 = vmatpush1.msra.mxu0 0.0
        %409 = vmatprep.subr.mxu0 0.0
        %410 = vmatpush1.msra.mxu0 0.0
        %411 = vmatprep.subr.mxu0 0.0
        %412 = vmatpush1.msra.mxu0 0.0
        %413 = vmatprep.subr.mxu0 0.0
        %414 = vmatpush1.msra.mxu0 0.0
        %415 = vmatprep.subr.mxu0 0.0
        %416 = vmatpush1.msra.mxu0 0.0
        %417 = vmatprep.subr.mxu0 0.0
        %418 = vmatpush1.msra.mxu0 0.0
        %419 = vmatprep.subr.mxu0 0.0
        %420 = vmatpush1.msra.mxu0 0.0
        %421 = vmatprep.subr.mxu0 0.0
        %422 = vmatpush1.msra.mxu0 0.0
        %423 = vmatprep.subr.mxu0 0.0
        %424 = vmatpush1.msra.mxu0 0.0
        %425 = vmatprep.subr.mxu0 0.0
        %426 = vmatpush1.msra.mxu0 0.0
        %427 = vmatprep.subr.mxu0 0.0
        %428 = vmatpush1.msra.mxu0 0.0
        %429 = vmatprep.subr.mxu0 0.0
        %430 = vmatpush1.msra.mxu0 0.0
        %431 = vmatprep.subr.mxu0 0.0
        %432 = vmatpush1.msra.mxu0 0.0
        %433 = vmatprep.subr.mxu0 0.0
        %434 = vmatpush1.msra.mxu0 0.0
        %435 = vmatprep.subr.mxu0 0.0
        %436 = vmatpush1.msra.mxu0 0.0
        %437 = vmatprep.subr.mxu0 0.0
        %438 = vmatpush1.msra.mxu0 0.0
        %439 = vmatprep.subr.mxu0 0.0
        %440 = vmatpush1.msra.mxu0 0.0
        %441 = vmatprep.subr.mxu0 0.0
        %442 = vmatpush1.msra.mxu0 0.0
        %443 = vmatprep.mubr.f32.mxu0 0.0
        %444 = vmatmul.mubr.f32.gmra.mrb[0].mxu0 %v368
        %v445 = vpop.f32.mrb[0].mxu0
        %v446 = vadd.f32 %v349, %v445
        %v447 = vpop.f32.mrb[0].mxu0
        %448 = vmatprep.mubr.f32.mxu0 0.0
        %449 = vmatmul.mubr.f32.gmra.mrb[0].mxu0 %v371
        %v450 = vpop.f32.mrb[0].mxu0
        %v451 = vadd.f32 %v354, %v450
        %v452 = vpop.f32.mrb[0].mxu0
        %453 = vmatprep.mubr.f32.mxu0 0.0
        %454 = vmatmul.mubr.f32.gmra.mrb[0].mxu0 %v374
        %v455 = vpop.f32.mrb[0].mxu0
        %v456 = vadd.f32 %v359, %v455
        %v457 = vpop.f32.mrb[0].mxu0
        %458 = vmatprep.mubr.f32.mxu0 0.0
        %459 = vmatmul.mubr.f32.gmra.mrb[0].mxu0 %v377
        %v460 = vpop.f32.mrb[0].mxu0
        %v461 = vadd.f32 %v364, %v460
        %v462 = vpop.f32.mrb[0].mxu0
        %463 = vdwg.mxu0
        %v464 = vtanh.pop %v446
        %v465 = vtanh.pop %v451
        %v466 = vtanh.pop %v456
        %v467 = vtanh.pop %v461
        %v468 = vld [vmem:[%s1 + $0x40] sm:$0xf]
        %v469 = vld [vmem:[%s1 + $0x88] sm:$0xf]
        %471 = vset.pattern.permute.xlu0 0
        %472 = vperm.xlu0 %471, %v469
        %v473 = vpop.permute.xlu0 %472
        %v476 = vsel %vm366, %v468, 0
        %478 = vmatprep.subr.mxu0 0.0
        %479 = vmatpush1.msra.mxu0 %v464
        %480 = vmatprep.subr.mxu0 0.0
        %481 = vmatpush1.msra.mxu0 %v465
        %482 = vmatprep.subr.mxu0 0.0
        %483 = vmatpush1.msra.mxu0 %v466
        %484 = vmatprep.subr.mxu0 0.0
        %485 = vmatpush1.msra.mxu0 %v467
        %486 = vmatprep.subr.mxu0 0.0
        %487 = vmatpush1.msra.mxu0 0.0
        %488 = vmatprep.subr.mxu0 0.0
        %489 = vmatpush1.msra.mxu0 0.0
        %490 = vmatprep.subr.mxu0 0.0
        %491 = vmatpush1.msra.mxu0 0.0
        %492 = vmatprep.subr.mxu0 0.0
        %493 = vmatpush1.msra.mxu0 0.0
        %494 = vmatprep.subr.mxu0 0.0
        %495 = vmatpush1.msra.mxu0 0.0
        %496 = vmatprep.subr.mxu0 0.0
        %497 = vmatpush1.msra.mxu0 0.0
        %498 = vmatprep.subr.mxu0 0.0
        %499 = vmatpush1.msra.mxu0 0.0
        %500 = vmatprep.subr.mxu0 0.0
        %501 = vmatpush1.msra.mxu0 0.0
        %502 = vmatprep.subr.mxu0 0.0
        %503 = vmatpush1.msra.mxu0 0.0
        %504 = vmatprep.subr.mxu0 0.0
        %505 = vmatpush1.msra.mxu0 0.0
        %506 = vmatprep.subr.mxu0 0.0
        %507 = vmatpush1.msra.mxu0 0.0
        %508 = vmatprep.subr.mxu0 0.0
        %509 = vmatpush1.msra.mxu0 0.0
        %510 = vmatprep.subr.mxu0 0.0
        %511 = vmatpush1.msra.mxu0 0.0
        %512 = vmatprep.subr.mxu0 0.0
        %513 = vmatpush1.msra.mxu0 0.0
        %514 = vmatprep.subr.mxu0 0.0
        %515 = vmatpush1.msra.mxu0 0.0
        %516 = vmatprep.subr.mxu0 0.0
        %517 = vmatpush1.msra.mxu0 0.0
        %518 = vmatprep.subr.mxu0 0.0
        %519 = vmatpush1.msra.mxu0 0.0
        %520 = vmatprep.subr.mxu0 0.0
        %521 = vmatpush1.msra.mxu0 0.0
        %522 = vmatprep.subr.mxu0 0.0
        %523 = vmatpush1.msra.mxu0 0.0
        %524 = vmatprep.subr.mxu0 0.0
        %525 = vmatpush1.msra.mxu0 0.0
        %526 = vmatprep.subr.mxu0 0.0
        %527 = vmatpush1.msra.mxu0 0.0
        %528 = vmatprep.subr.mxu0 0.0
        %529 = vmatpush1.msra.mxu0 0.0
        %530 = vmatprep.subr.mxu0 0.0
        %531 = vmatpush1.msra.mxu0 0.0
        %532 = vmatprep.subr.mxu0 0.0
        %533 = vmatpush1.msra.mxu0 0.0
        %534 = vmatprep.subr.mxu0 0.0
        %535 = vmatpush1.msra.mxu0 0.0
        %536 = vmatprep.subr.mxu0 0.0
        %537 = vmatpush1.msra.mxu0 0.0
        %538 = vmatprep.subr.mxu0 0.0
        %539 = vmatpush1.msra.mxu0 0.0
        %540 = vmatprep.subr.mxu0 0.0
        %541 = vmatpush1.msra.mxu0 0.0
        %542 = vmatprep.mubr.f32.mxu0 0.0
        %543 = vmatmul.mubr.f32.gmra.mrb[0].mxu0 %v476
        %v544 = vpop.f32.mrb[0].mxu0
        %v545 = vadd.f32 %v473, %v544
        %v546 = vpop.f32.mrb[0].mxu0
        %547 = vdwg.mxu0
        %548 = vst [vmem:[%s137] sm:$0xf] %v545
        %s549 = sand.u32 %s71, 1
        %s550 = scalar_lea.sflag [#allocation3], %s549
        %s551 = sand.u32 %s71, 1
        %s552 = smul.addr %s551, 4
        %s553 = scalar_lea.vmem [#allocation2], %s552
        // Predicated region
        $region29: #{fwd.1} parent=27 // pred_check
          %p554 = pneg %p81
        $region30: #{fwd.1} parent=27 // pred_check_branch
          %556 = sbr.rel (%p554) target = $region32
        $region31: #{fwd.1} parent=27 // pred_region
          %s558 = ssub.s32 64, 64
          %559 = vsyncadd %s550, %s558
          %s560 = smul.addr %s16, 64
          %s561 = scalar_lea.hbm %s2, %s560
          %s563 = sshll.u32 %s553, 4
          %s564 = int_to_ptr.vmem [resolvable:$true] %s563
          %566 = dma.vmem_to_hbm [thread:$0]  %s564, 64, %s561, %s550
        $region32: #{fwd.1} parent=27 // pred_fallthru
          _
      $region28: #{fwd.1} parent=5 // pred_fallthru
        _
      %p567 = scmp.le.s32.totalorder 2, %s11
      // Predicated region
      $region33: #{fwd.1} parent=5 // pred_check
        %p568 = pneg %p567
      $region34: #{fwd.1} parent=5 // pred_check_branch
        %570 = sbr.rel (%p568) target = $region36
      $region35: #{fwd.1} parent=5 // pred_region
        %s571 = ssub.s32 %s11, 2
        // Predicated region
        $region37: #{fwd.1} parent=35 // pred_check
          %p572 = pneg %p87
        $region38: #{fwd.1} parent=35 // pred_check_branch
          %574 = sbr.rel (%p572) target = $region40
        $region39: #{fwd.1} parent=35 // pred_region
          %s575 = sand.u32 %s72, 1
          %s576 = scalar_lea.sflag [#allocation3], %s575
          %s577 = sand.u32 %s72, 1
          %s578 = smul.addr %s577, 4
          %s579 = scalar_lea.vmem [#allocation2], %s578
          %580 = dma.done %s576, 64
        $region40: #{fwd.1} parent=35 // pred_fallthru
          _
      $region36: #{fwd.1} parent=5 // pred_fallthru
        _
    $region6: #{fwd.1} parent=1 // loop_footer
      %s15 = sadd.s32 1, %s11
    $region7: #{fwd.1} parent=1 // loop_footer_branch
      %10 = sbr.rel target = $region3
    $region8: #{fwd.1} parent=1 // loop_exit
      _
    %581 = vsyncpa [#allocation3], 1
    %s582 = scalar_lea.sflag [#allocation3], 1
    %583 = vsyncpa %s582, 1

</llo_original>
